<compile_context>
chip_gen: v6e
topology: v6e:2x2x1
jax: 0.10.0
libtpu: 0.0.40
codegen_flags: <defaults>
</compile_context>

<pallas_src>
import functools

import jax
import jax.numpy as jnp
from jax import lax
from jax.experimental import pallas as pl
from jax.experimental.pallas import tpu as pltpu

# Large-negative finite mask value (avoids inf-inf NaNs in the online update).
_MASK_VALUE = -1e30


def _contrastive_loss_kernel(q_ref, k_ref, loss_ref, qs_ref, m_ref, l_ref, d_ref,
                             *, inv_t, n_valid, block_k):
    """One (query block, key block) step of the flash-style online logsumexp."""
    j = pl.program_id(1)            # key block (reduction axis)
    nk = pl.num_programs(1)

    @pl.when(j == 0)
    def _init():
        # Hoisted per-query-block work: scale + cast the resident query tile
        # once (not on every key step) and compute the diagonal term
        #   sim[i, i] = ||f_i||^2 / T
        # directly from it, independent of the key tiling.
        q32 = q_ref[...].astype(jnp.float32)                       # (Tq, D)
        qs = (q32 * inv_t).astype(qs_ref.dtype)                    # bf16, scaled
        qs_ref[...] = qs
        d_ref[...] = jnp.sum(qs.astype(jnp.float32) * q32, axis=-1, keepdims=True)
        m_ref[...] = jnp.full(m_ref.shape, _MASK_VALUE, dtype=jnp.float32)
        l_ref[...] = jnp.zeros(l_ref.shape, dtype=jnp.float32)

    # sim block = (q / T) @ k.T on the MXU in bf16, f32 accumulate; contract
    # over D for both operands (no explicit transpose).
    s = lax.dot_general(
        qs_ref[...], k_ref[...],
        dimension_numbers=(((1,), (1,)), ((), ())),
        preferred_element_type=jnp.float32,
    )                                                              # (Tq, Tk) f32

    if n_valid % block_k != 0:
        # Static check: padding exists (only possible in the last key block).
        # Mask padded key columns so they never contribute to max/sum.
        col = j * block_k + lax.broadcasted_iota(jnp.int32, s.shape, 1)
        s = jnp.where(col < n_valid, s, _MASK_VALUE)

    # Online (flash-style) logsumexp update.
    m_prev = m_ref[...]                                            # (Tq, 1)
    m_new = jnp.maximum(m_prev, jnp.max(s, axis=-1, keepdims=True))
    alpha = jnp.exp(m_prev - m_new)
    l_ref[...] = alpha * l_ref[...] + jnp.sum(jnp.exp(s - m_new), axis=-1, keepdims=True)
    m_ref[...] = m_new

    @pl.when(j == nk - 1)
    def _finalize():
        # loss_i = logsumexp_i - sim[i, i]
        loss_ref[...] = m_ref[...] + jnp.log(l_ref[...]) - d_ref[...]


def _round_up(x: int, m: int) -> int:
    return (x + m - 1) // m * m


def _choose_tiles(n_pad: int, d: int, *, vmem_budget: int = 32 * 1024 * 1024):
    """Decoupled (Tq, Tk): modest streamed key tile, large resident query tile."""
    tiles = [t for t in range(128, n_pad + 1, 128) if n_pad % t == 0]
    # Key tile: streamed & double-buffered over the reduction axis.
    tk = max((t for t in tiles if t <= 512), default=tiles[0])

    def fits(tq):
        q_bytes = 3 * tq * d * 2        # double-buffered q input + scaled scratch (bf16)
        k_bytes = 2 * tk * d * 2        # double-buffered key tile (bf16)
        s_bytes = 4 * tq * tk * 4       # s / exp / select intermediates (f32)
        return q_bytes + k_bytes + s_bytes <= vmem_budget

    fitting = [t for t in tiles if fits(t)] or [tiles[0]]
    # Prefer >= 2 query blocks so both v7x TensorCores get work ("parallel" axis).
    two_core = [t for t in fitting if n_pad // t >= 2]
    tq = max(two_core) if two_core else max(fitting)
    return tq, tk


def contrastive_loss(features: jax.Array, temperature: float = 0.07) -> jax.Array:
    """features: [N, D]. Scalar f32 cross_entropy(features @ features.T / T, eye(N))."""
    n, d = features.shape
    n_pad = _round_up(max(n, 128), 128)

    # bf16 MXU operands (also halves HBM streaming of the key matrix).
    f = features.astype(jnp.bfloat16)
    if n_pad != n:
        f = jnp.pad(f, ((0, n_pad - n), (0, 0)))

    tq, tk = _choose_tiles(n_pad, d)
    grid = (n_pad // tq, n_pad // tk)

    kernel = functools.partial(
        _contrastive_loss_kernel,
        inv_t=float(1.0 / temperature), n_valid=n, block_k=tk)

    per_row = pl.pallas_call(
        kernel,
        out_shape=jax.ShapeDtypeStruct((n_pad, 1), jnp.float32),
        grid_spec=pltpu.PrefetchScalarGridSpec(
            num_scalar_prefetch=0,
            grid=grid,
            in_specs=[
                pl.BlockSpec((tq, d), lambda i, j: (i, 0)),   # query rows (resident per i)
                pl.BlockSpec((tk, d), lambda i, j: (j, 0)),   # key rows (streamed over j)
            ],
            out_specs=pl.BlockSpec((tq, 1), lambda i, j: (i, 0)),
            scratch_shapes=[
                pltpu.VMEM((tq, d), jnp.bfloat16),   # scaled query tile (hoisted)
                pltpu.VMEM((tq, 1), jnp.float32),    # running row max
                pltpu.VMEM((tq, 1), jnp.float32),    # running row sum
                pltpu.VMEM((tq, 1), jnp.float32),    # diagonal sim[i, i]
            ],
        ),
        compiler_params=pltpu.CompilerParams(
            dimension_semantics=("parallel", "arbitrary"),
            vmem_limit_bytes=64 * 1024 * 1024,
        ),
    )(f, f)

    # Exclude padded rows from the mean.
    return jnp.sum(per_row[:n, 0]) / n


def _reference_loss(features: jax.Array, temperature: float = 0.07) -> jax.Array:
    f = features.astype(jnp.float32)
    sim = jnp.dot(f, f.T, precision=lax.Precision.HIGHEST) / temperature
    logp = jax.nn.log_softmax(sim, axis=-1)
    labels = jnp.eye(f.shape[0], dtype=jnp.float32)
    return jnp.mean(-jnp.sum(labels * logp, axis=-1))


if __name__ == "__main__":
    key = jax.random.PRNGKey(0)
    k1, k2, k3 = jax.random.split(key, 3)

    def check(f, t, rtol=2e-2, atol=2e-2):
        got = jax.block_until_ready(
            jax.jit(functools.partial(contrastive_loss, temperature=t))(f))
        want = _reference_loss(f, t)
        assert jnp.allclose(got, want, rtol=rtol, atol=atol), (got, want)

    # 1) Tiny padded case (N=8 < 128): exercises key-column masking + row exclusion.
    f1 = jax.random.normal(k1, (8, 32), jnp.float32)
    f1 = f1 / jnp.linalg.norm(f1, axis=-1, keepdims=True)
    check(f1, 0.5)

    # 2) Multi-block case (N=256, D=128): exercises the online logsumexp /
    #    accumulator / hoisted-scratch path across a multi-block grid.
    f2 = jax.random.normal(k2, (256, 128), jnp.float32)
    f2 = f2 / jnp.linalg.norm(f2, axis=-1, keepdims=True)
    check(f2, 0.2)

    # 3) Non-multiple N (200) with padding: padded tail masked, rows excluded.
    f3 = jax.random.normal(k3, (200, 64), jnp.float32)
    f3 = f3 / jnp.linalg.norm(f3, axis=-1, keepdims=True)
    check(f3, 0.5)

    print("KERNEL_OK")
</pallas_src>

<mosaic_0001>
module attributes {stable_mosaic.version = 11 : i64} {
  func.func @_contrastive_loss_kernel(%arg0: i32, %arg1: i32, %arg2: memref<128x32xbf16, #tpu.memory_space<vmem>>, %arg3: memref<128x32xbf16, #tpu.memory_space<vmem>>, %arg4: memref<128x1xf32, #tpu.memory_space<vmem>>, %arg5: memref<128x32xbf16, #tpu.memory_space<vmem>>, %arg6: memref<128x1xf32, #tpu.memory_space<vmem>>, %arg7: memref<128x1xf32, #tpu.memory_space<vmem>>, %arg8: memref<128x1xf32, #tpu.memory_space<vmem>>) attributes {dimension_semantics = [#tpu.dimension_semantics<parallel>, #tpu.dimension_semantics<arbitrary>], iteration_bounds = array<i64: 1, 1>, scalar_prefetch = 0 : i64, scratch_operands = 4 : i64, tpu.core_type = #tpu.core_type<tc>, window_params = [{transform_indices = @transform_0, window_bounds = array<i64: 128, 32>}, {transform_indices = @transform_1, window_bounds = array<i64: 128, 32>}, {transform_indices = @transform_2, window_bounds = array<i64: 128, 1>}]} {
    %c0_i32 = arith.constant 0 : i32
    %0 = arith.cmpi eq, %arg1, %c0_i32 : i32
    %1 = arith.extui %0 : i1 to i32
    %c0_i32_0 = arith.constant 0 : i32
    %2 = arith.cmpi ne, %1, %c0_i32_0 : i32
    scf.if %2 {
      %c0_17 = arith.constant 0 : index
      %c0_18 = arith.constant 0 : index
      %33 = vector.load %arg2[%c0_17, %c0_18] : memref<128x32xbf16, #tpu.memory_space<vmem>>, vector<128x32xbf16>
      %34 = arith.extf %33 : vector<128x32xbf16> to vector<128x32xf32>
      %cst_19 = arith.constant 2.000000e+00 : f32
      %35 = vector.broadcast %cst_19 : f32 to vector<128x32xf32>
      %36 = arith.mulf %34, %35 : vector<128x32xf32>
      %37 = arith.truncf %36 : vector<128x32xf32> to vector<128x32xbf16>
      %c0_20 = arith.constant 0 : index
      %c0_21 = arith.constant 0 : index
      %38 = vector.load %arg5[%c0_20, %c0_21] : memref<128x32xbf16, #tpu.memory_space<vmem>>, vector<128x32xbf16>
      tpu.vector_store %arg5[%c0_20, %c0_21], %37 {strides = array<i32>} : memref<128x32xbf16, #tpu.memory_space<vmem>>, vector<128x32xbf16>,
      %39 = arith.extf %37 : vector<128x32xbf16> to vector<128x32xf32>
      %40 = arith.mulf %39, %34 : vector<128x32xf32>
      %cst_22 = arith.constant dense<0.000000e+00> : vector<128xf32>
      %41 = vector.multi_reduction <add>, %40, %cst_22 [1] : vector<128x32xf32> to vector<128xf32>
      %42 = vector.shape_cast %41 : vector<128xf32> to vector<128x1xf32>
      %c0_23 = arith.constant 0 : index
      %c0_24 = arith.constant 0 : index
      %43 = vector.load %arg8[%c0_23, %c0_24] : memref<128x1xf32, #tpu.memory_space<vmem>>, vector<128x1xf32>
      tpu.vector_store %arg8[%c0_23, %c0_24], %42 {strides = array<i32>} : memref<128x1xf32, #tpu.memory_space<vmem>>, vector<128x1xf32>,
      %cst_25 = arith.constant -1.000000e+30 : f32
      %44 = vector.broadcast %cst_25 : f32 to vector<128x1xf32>
      %c0_26 = arith.constant 0 : index
      %c0_27 = arith.constant 0 : index
      %45 = vector.load %arg6[%c0_26, %c0_27] : memref<128x1xf32, #tpu.memory_space<vmem>>, vector<128x1xf32>
      tpu.vector_store %arg6[%c0_26, %c0_27], %44 {strides = array<i32>} : memref<128x1xf32, #tpu.memory_space<vmem>>, vector<128x1xf32>,
      %cst_28 = arith.constant 0.000000e+00 : f32
      %46 = vector.broadcast %cst_28 : f32 to vector<128x1xf32>
      %c0_29 = arith.constant 0 : index
      %c0_30 = arith.constant 0 : index
      %47 = vector.load %arg7[%c0_29, %c0_30] : memref<128x1xf32, #tpu.memory_space<vmem>>, vector<128x1xf32>
      tpu.vector_store %arg7[%c0_29, %c0_30], %46 {strides = array<i32>} : memref<128x1xf32, #tpu.memory_space<vmem>>, vector<128x1xf32>,
    } else {
    }
    %c0 = arith.constant 0 : index
    %c0_1 = arith.constant 0 : index
    %3 = vector.load %arg5[%c0, %c0_1] : memref<128x32xbf16, #tpu.memory_space<vmem>>, vector<128x32xbf16>
    %c0_2 = arith.constant 0 : index
    %c0_3 = arith.constant 0 : index
    %4 = vector.load %arg3[%c0_2, %c0_3] : memref<128x32xbf16, #tpu.memory_space<vmem>>, vector<128x32xbf16>
    %cst = arith.constant dense<0.000000e+00> : vector<128x128xf32>
    %5 = tpu.matmul %3, %4, %cst {dimension_numbers = #tpu.dot_dimension_numbers<[1], [1], [0], [0], [0, 0, 1, 0], [], []>} : vector<128x32xbf16>, vector<128x32xbf16>, vector<128x128xf32> -> vector<128x128xf32>
    %c128_i32 = arith.constant 128 : i32
    %6 = arith.muli %arg1, %c128_i32 : i32
    %7 = tpu.iota {dimensions = array<i32: 1>} : vector<128x128xi32>
    %8 = vector.broadcast %6 : i32 to vector<128x128xi32>
    %9 = arith.addi %8, %7 : vector<128x128xi32>
    %c8_i32 = arith.constant 8 : i32
    %10 = vector.broadcast %c8_i32 : i32 to vector<128x128xi32>
    %11 = arith.cmpi slt, %9, %10 : vector<128x128xi32>
    %cst_4 = arith.constant -1.000000e+30 : f32
    %12 = vector.broadcast %cst_4 : f32 to vector<128x128xf32>
    %13 = arith.select %11, %5, %12 : vector<128x128xi1>, vector<128x128xf32>
    %c0_5 = arith.constant 0 : index
    %c0_6 = arith.constant 0 : index
    %14 = vector.load %arg6[%c0_5, %c0_6] : memref<128x1xf32, #tpu.memory_space<vmem>>, vector<128x1xf32>
    %cst_7 = arith.constant dense<0xFF800000> : vector<128xf32>
    %15 = vector.multi_reduction <maximumf>, %13, %cst_7 [1] : vector<128x128xf32> to vector<128xf32>
    %16 = vector.shape_cast %15 : vector<128xf32> to vector<128x1xf32>
    %17 = arith.maximumf %14, %16 : vector<128x1xf32>
    %18 = arith.subf %14, %17 : vector<128x1xf32>
    %19 = math.exp %18 : vector<128x1xf32>
    %c0_8 = arith.constant 0 : index
    %c0_9 = arith.constant 0 : index
    %20 = vector.load %arg7[%c0_8, %c0_9] : memref<128x1xf32, #tpu.memory_space<vmem>>, vector<128x1xf32>
    %21 = arith.mulf %19, %20 : vector<128x1xf32>
    %22 = vector.broadcast %17 : vector<128x1xf32> to vector<128x128xf32>
    %23 = arith.subf %13, %22 : vector<128x128xf32>
    %24 = math.exp %23 : vector<128x128xf32>
    %cst_10 = arith.constant dense<0.000000e+00> : vector<128xf32>
    %25 = vector.multi_reduction <add>, %24, %cst_10 [1] : vector<128x128xf32> to vector<128xf32>
    %26 = vector.shape_cast %25 : vector<128xf32> to vector<128x1xf32>
    %27 = arith.addf %21, %26 : vector<128x1xf32>
    %c0_11 = arith.constant 0 : index
    %c0_12 = arith.constant 0 : index
    %28 = vector.load %arg7[%c0_11, %c0_12] : memref<128x1xf32, #tpu.memory_space<vmem>>, vector<128x1xf32>
    tpu.vector_store %arg7[%c0_11, %c0_12], %27 {strides = array<i32>} : memref<128x1xf32, #tpu.memory_space<vmem>>, vector<128x1xf32>,
    %c0_13 = arith.constant 0 : index
    %c0_14 = arith.constant 0 : index
    %29 = vector.load %arg6[%c0_13, %c0_14] : memref<128x1xf32, #tpu.memory_space<vmem>>, vector<128x1xf32>
    tpu.vector_store %arg6[%c0_13, %c0_14], %17 {strides = array<i32>} : memref<128x1xf32, #tpu.memory_space<vmem>>, vector<128x1xf32>,
    %c0_i32_15 = arith.constant 0 : i32
    %30 = arith.cmpi eq, %arg1, %c0_i32_15 : i32
    %31 = arith.extui %30 : i1 to i32
    %c0_i32_16 = arith.constant 0 : i32
    %32 = arith.cmpi ne, %31, %c0_i32_16 : i32
    scf.if %32 {
      %c0_17 = arith.constant 0 : index
      %c0_18 = arith.constant 0 : index
      %33 = vector.load %arg6[%c0_17, %c0_18] : memref<128x1xf32, #tpu.memory_space<vmem>>, vector<128x1xf32>
      %c0_19 = arith.constant 0 : index
      %c0_20 = arith.constant 0 : index
      %34 = vector.load %arg7[%c0_19, %c0_20] : memref<128x1xf32, #tpu.memory_space<vmem>>, vector<128x1xf32>
      %35 = math.log %34 : vector<128x1xf32>
      %36 = arith.addf %33, %35 : vector<128x1xf32>
      %c0_21 = arith.constant 0 : index
      %c0_22 = arith.constant 0 : index
      %37 = vector.load %arg8[%c0_21, %c0_22] : memref<128x1xf32, #tpu.memory_space<vmem>>, vector<128x1xf32>
      %38 = arith.subf %36, %37 : vector<128x1xf32>
      %c0_23 = arith.constant 0 : index
      %c0_24 = arith.constant 0 : index
      %39 = vector.load %arg4[%c0_23, %c0_24] : memref<128x1xf32, #tpu.memory_space<vmem>>, vector<128x1xf32>
      tpu.vector_store %arg4[%c0_23, %c0_24], %38 {strides = array<i32>} : memref<128x1xf32, #tpu.memory_space<vmem>>, vector<128x1xf32>,
    } else {
    }
    return
  }
  func.func @transform_0(%arg0: i32, %arg1: i32) -> (i32, i32) {
    %c0_i32 = arith.constant 0 : i32
    %c0_i32_0 = arith.constant 0 : i32
    return %arg0, %c0_i32 : i32, i32
  }
  func.func @transform_1(%arg0: i32, %arg1: i32) -> (i32, i32) {
    %c0_i32 = arith.constant 0 : i32
    %c0_i32_0 = arith.constant 0 : i32
    return %arg1, %c0_i32 : i32, i32
  }
  func.func @transform_2(%arg0: i32, %arg1: i32) -> (i32, i32) {
    %c0_i32 = arith.constant 0 : i32
    %c0_i32_0 = arith.constant 0 : i32
    return %arg0, %c0_i32 : i32, i32
  }
}

</mosaic_0001>

<llo_original>
// kernel: contrastive_loss.1
$region0: #{contrastive_loss.1}
  #allocation0 [shape = 'u32[]', space=smem, size = 0x4, offset = 0x4, fixed_abs, tag = 'smem constant byte address 0x4 - core index']
  #allocation1 [shape = 'u32[144,128]{1,0:T(1,128)}', space=vmem, size = 0x12000, scoped, tag = 'internal scratch']
  #allocation2 [shape = 'bf16[128,32]{1,0:T(8,128)(2,1)}', space=vmem, size = 0x8000, scoped, tag = 'scratch operand']
  #allocation3 [shape = 'f32[128,1]{1,0:T(8,128)}', space=vmem, size = 0x10000, scoped, tag = 'scratch operand']
  #allocation4 [shape = 'f32[128,1]{1,0:T(8,128)}', space=vmem, size = 0x10000, scoped, tag = 'scratch operand']
  #allocation5 [shape = 'f32[128,1]{1,0:T(8,128)}', space=vmem, size = 0x10000, scoped, tag = 'scratch operand']
  %s0 = inlined_call_operand.vmem [shape: bf16[128,32], index: 0, kind: input, shape index: {}, may-alias: {0,1}]
  %s1 = inlined_call_operand.vmem [shape: bf16[128,32], index: 1, kind: input, shape index: {}, may-alias: {0,1}]
  %s2 = inlined_call_operand.vmem [shape: f32[128,1], index: 2, kind: output, shape index: {}]
  %s3 = sld [smem:[#allocation0]]
  $region26: #{contrastive_loss.1} parent=0
    _
  %s5 = ssub.s32 1, %s3
  %s6 = scalar_select 0, %s5, %s3
  // Predicated region
  $region2: #{contrastive_loss.1} parent=0 // pred_check
    _
  $region3: #{contrastive_loss.1} parent=0 // pred_check_branch
    %8 = sbr.rel (0) target = $region5
  $region4: #{contrastive_loss.1} parent=0 // pred_region
    _
  $region5: #{contrastive_loss.1} parent=0 // pred_fallthru
    _
  // Predicated region
  $region6: #{contrastive_loss.1} parent=0 // pred_check
    _
  $region7: #{contrastive_loss.1} parent=0 // pred_check_branch
    %10 = sbr.rel (0) target = $region9
  $region8: #{contrastive_loss.1} parent=0 // pred_region
    _
  $region9: #{contrastive_loss.1} parent=0 // pred_fallthru
    _
  %p12 = scmp.eq.s32.totalorder 0, 0
  // Predicated region
  $region10: #{contrastive_loss.1} parent=0 // pred_check
    %p13 = pneg %p12
  $region11: #{contrastive_loss.1} parent=0 // pred_check_branch
    %15 = sbr.rel (%p13) target = $region13
  $region12: #{contrastive_loss.1} parent=0 // pred_region
    %v16 = vld [vmem:[%s0] sm:$0xf]
    %v17 = vld [vmem:[%s0 + $0x4] sm:$0xf]
    %v18 = vld [vmem:[%s0 + $0x8] sm:$0xf]
    %v19 = vld [vmem:[%s0 + $0xc] sm:$0xf]
    %v20 = vld [vmem:[%s0 + $0x10] sm:$0xf]
    %v21 = vld [vmem:[%s0 + $0x14] sm:$0xf]
    %v22 = vld [vmem:[%s0 + $0x18] sm:$0xf]
    %v23 = vld [vmem:[%s0 + $0x1c] sm:$0xf]
    %v24 = vld [vmem:[%s0 + $0x20] sm:$0xf]
    %v25 = vld [vmem:[%s0 + $0x24] sm:$0xf]
    %v26 = vld [vmem:[%s0 + $0x28] sm:$0xf]
    %v27 = vld [vmem:[%s0 + $0x2c] sm:$0xf]
    %v28 = vld [vmem:[%s0 + $0x30] sm:$0xf]
    %v29 = vld [vmem:[%s0 + $0x34] sm:$0xf]
    %v30 = vld [vmem:[%s0 + $0x38] sm:$0xf]
    %v31 = vld [vmem:[%s0 + $0x3c] sm:$0xf]
    %v32 = vunpack.c.l.bf16 %v16
    %v33 = vunpack.c.l.bf16 %v17
    %v34 = vunpack.c.l.bf16 %v18
    %v35 = vunpack.c.l.bf16 %v19
    %v36 = vunpack.c.l.bf16 %v20
    %v37 = vunpack.c.l.bf16 %v21
    %v38 = vunpack.c.l.bf16 %v22
    %v39 = vunpack.c.l.bf16 %v23
    %v40 = vunpack.c.l.bf16 %v24
    %v41 = vunpack.c.l.bf16 %v25
    %v42 = vunpack.c.l.bf16 %v26
    %v43 = vunpack.c.l.bf16 %v27
    %v44 = vunpack.c.l.bf16 %v28
    %v45 = vunpack.c.l.bf16 %v29
    %v46 = vunpack.c.l.bf16 %v30
    %v47 = vunpack.c.l.bf16 %v31
    %v48 = vmul.f32 %v32, 2.0
    %v49 = vmul.f32 %v33, 2.0
    %v50 = vmul.f32 %v34, 2.0
    %v51 = vmul.f32 %v35, 2.0
    %v52 = vmul.f32 %v36, 2.0
    %v53 = vmul.f32 %v37, 2.0
    %v54 = vmul.f32 %v38, 2.0
    %v55 = vmul.f32 %v39, 2.0
    %v56 = vmul.f32 %v40, 2.0
    %v57 = vmul.f32 %v41, 2.0
    %v58 = vmul.f32 %v42, 2.0
    %v59 = vmul.f32 %v43, 2.0
    %v60 = vmul.f32 %v44, 2.0
    %v61 = vmul.f32 %v45, 2.0
    %v62 = vmul.f32 %v46, 2.0
    %v63 = vmul.f32 %v47, 2.0
    %v64 = vpack.c.bf16 %v49, %v48
    %v65 = vpack.c.bf16 %v51, %v50
    %v66 = vpack.c.bf16 %v53, %v52
    %v67 = vpack.c.bf16 %v55, %v54
    %v68 = vpack.c.bf16 %v57, %v56
    %v69 = vpack.c.bf16 %v59, %v58
    %v70 = vpack.c.bf16 %v61, %v60
    %v71 = vpack.c.bf16 %v63, %v62
    %v80 = vunpack.c.l.b16 %v64
    %v81 = vunpack.c.h.b16 %v64
    %v82 = vunpack.c.l.b16 %v65
    %v83 = vunpack.c.h.b16 %v65
    %v84 = vunpack.c.l.b16 %v66
    %v85 = vunpack.c.h.b16 %v66
    %v86 = vunpack.c.l.b16 %v67
    %v87 = vunpack.c.h.b16 %v67
    %v88 = vunpack.c.l.b16 %v68
    %v89 = vunpack.c.h.b16 %v68
    %v90 = vunpack.c.l.b16 %v69
    %v91 = vunpack.c.h.b16 %v69
    %v92 = vunpack.c.l.b16 %v70
    %v93 = vunpack.c.h.b16 %v70
    %v94 = vunpack.c.l.b16 %v71
    %v95 = vunpack.c.h.b16 %v71
    %v96 = vpack.c.b16 %v80, %v80
    %v97 = vpack.c.b16 %v81, %v81
    %v98 = vpack.c.b16 %v82, %v82
    %v99 = vpack.c.b16 %v83, %v83
    %v100 = vpack.c.b16 %v84, %v84
    %v101 = vpack.c.b16 %v85, %v85
    %v102 = vpack.c.b16 %v86, %v86
    %v103 = vpack.c.b16 %v87, %v87
    %v104 = vpack.c.b16 %v88, %v88
    %v105 = vpack.c.b16 %v89, %v89
    %v106 = vpack.c.b16 %v90, %v90
    %v107 = vpack.c.b16 %v91, %v91
    %v108 = vpack.c.b16 %v92, %v92
    %v109 = vpack.c.b16 %v93, %v93
    %v110 = vpack.c.b16 %v94, %v94
    %v111 = vpack.c.b16 %v95, %v95
    %vm128 = vcmask 257024
    %129 = vst.msk [vmem:[#allocation2] sm:$0xf] %vm128, %v96
    %130 = vst.msk [vmem:[#allocation2 + $0x4] sm:$0xf] %vm128, %v97
    %131 = vst.msk [vmem:[#allocation2 + $0x8] sm:$0xf] %vm128, %v98
    %132 = vst.msk [vmem:[#allocation2 + $0xc] sm:$0xf] %vm128, %v99
    %133 = vst.msk [vmem:[#allocation2 + $0x10] sm:$0xf] %vm128, %v100
    %134 = vst.msk [vmem:[#allocation2 + $0x14] sm:$0xf] %vm128, %v101
    %135 = vst.msk [vmem:[#allocation2 + $0x18] sm:$0xf] %vm128, %v102
    %136 = vst.msk [vmem:[#allocation2 + $0x1c] sm:$0xf] %vm128, %v103
    %137 = vst.msk [vmem:[#allocation2 + $0x20] sm:$0xf] %vm128, %v104
    %138 = vst.msk [vmem:[#allocation2 + $0x24] sm:$0xf] %vm128, %v105
    %139 = vst.msk [vmem:[#allocation2 + $0x28] sm:$0xf] %vm128, %v106
    %140 = vst.msk [vmem:[#allocation2 + $0x2c] sm:$0xf] %vm128, %v107
    %141 = vst.msk [vmem:[#allocation2 + $0x30] sm:$0xf] %vm128, %v108
    %142 = vst.msk [vmem:[#allocation2 + $0x34] sm:$0xf] %vm128, %v109
    %143 = vst.msk [vmem:[#allocation2 + $0x38] sm:$0xf] %vm128, %v110
    %144 = vst.msk [vmem:[#allocation2 + $0x3c] sm:$0xf] %vm128, %v111
    %v145 = vunpack.c.l.bf16 %v64
    %v146 = vunpack.c.h.bf16 %v64
    %v147 = vunpack.c.l.bf16 %v65
    %v148 = vunpack.c.h.bf16 %v65
    %v149 = vunpack.c.l.bf16 %v66
    %v150 = vunpack.c.h.bf16 %v66
    %v151 = vunpack.c.l.bf16 %v67
    %v152 = vunpack.c.h.bf16 %v67
    %v153 = vunpack.c.l.bf16 %v68
    %v154 = vunpack.c.h.bf16 %v68
    %v155 = vunpack.c.l.bf16 %v69
    %v156 = vunpack.c.h.bf16 %v69
    %v157 = vunpack.c.l.bf16 %v70
    %v158 = vunpack.c.h.bf16 %v70
    %v159 = vunpack.c.l.bf16 %v71
    %v160 = vunpack.c.h.bf16 %v71
    %v161 = vmul.f32 %v145, %v32
    %v162 = vmul.f32 %v146, %v33
    %v163 = vmul.f32 %v147, %v34
    %v164 = vmul.f32 %v148, %v35
    %v165 = vmul.f32 %v149, %v36
    %v166 = vmul.f32 %v150, %v37
    %v167 = vmul.f32 %v151, %v38
    %v168 = vmul.f32 %v152, %v39
    %v169 = vmul.f32 %v153, %v40
    %v170 = vmul.f32 %v154, %v41
    %v171 = vmul.f32 %v155, %v42
    %v172 = vmul.f32 %v156, %v43
    %v173 = vmul.f32 %v157, %v44
    %v174 = vmul.f32 %v158, %v45
    %v175 = vmul.f32 %v159, %v46
    %v176 = vmul.f32 %v160, %v47
    %vm177 = vcmask 261120
    %v178 = vsel %vm177, %v161, 0.0
    %179 = vadd.xlane.f32.xlu0 %v178
    %v180 = vpop.xlane.xlu0 %179
    %v181 = vsel %vm177, %v162, 0.0
    %182 = vadd.xlane.f32.xlu0 %v181
    %v183 = vpop.xlane.xlu0 %182
    %v184 = vsel %vm177, %v163, 0.0
    %185 = vadd.xlane.f32.xlu0 %v184
    %v186 = vpop.xlane.xlu0 %185
    %v187 = vsel %vm177, %v164, 0.0
    %188 = vadd.xlane.f32.xlu0 %v187
    %v189 = vpop.xlane.xlu0 %188
    %v190 = vsel %vm177, %v165, 0.0
    %191 = vadd.xlane.f32.xlu0 %v190
    %v192 = vpop.xlane.xlu0 %191
    %v193 = vsel %vm177, %v166, 0.0
    %194 = vadd.xlane.f32.xlu0 %v193
    %v195 = vpop.xlane.xlu0 %194
    %v196 = vsel %vm177, %v167, 0.0
    %197 = vadd.xlane.f32.xlu0 %v196
    %v198 = vpop.xlane.xlu0 %197
    %v199 = vsel %vm177, %v168, 0.0
    %200 = vadd.xlane.f32.xlu0 %v199
    %v201 = vpop.xlane.xlu0 %200
    %v202 = vsel %vm177, %v169, 0.0
    %203 = vadd.xlane.f32.xlu0 %v202
    %v204 = vpop.xlane.xlu0 %203
    %v205 = vsel %vm177, %v170, 0.0
    %206 = vadd.xlane.f32.xlu0 %v205
    %v207 = vpop.xlane.xlu0 %206
    %v208 = vsel %vm177, %v171, 0.0
    %209 = vadd.xlane.f32.xlu0 %v208
    %v210 = vpop.xlane.xlu0 %209
    %v211 = vsel %vm177, %v172, 0.0
    %212 = vadd.xlane.f32.xlu0 %v211
    %v213 = vpop.xlane.xlu0 %212
    %v214 = vsel %vm177, %v173, 0.0
    %215 = vadd.xlane.f32.xlu0 %v214
    %v216 = vpop.xlane.xlu0 %215
    %v217 = vsel %vm177, %v174, 0.0
    %218 = vadd.xlane.f32.xlu0 %v217
    %v219 = vpop.xlane.xlu0 %218
    %v220 = vsel %vm177, %v175, 0.0
    %221 = vadd.xlane.f32.xlu0 %v220
    %v222 = vpop.xlane.xlu0 %221
    %v223 = vsel %vm177, %v176, 0.0
    %224 = vadd.xlane.f32.xlu0 %v223
    %v225 = vpop.xlane.xlu0 %224
    %vm226 = vcmask 7168
    %227 = vst.msk [vmem:[#allocation5] sm:$0xff] %vm226, %v180
    %228 = vst.msk [vmem:[#allocation5 + $0x8] sm:$0xff] %vm226, %v183
    %229 = vst.msk [vmem:[#allocation5 + $0x10] sm:$0xff] %vm226, %v186
    %230 = vst.msk [vmem:[#allocation5 + $0x18] sm:$0xff] %vm226, %v189
    %231 = vst.msk [vmem:[#allocation5 + $0x20] sm:$0xff] %vm226, %v192
    %232 = vst.msk [vmem:[#allocation5 + $0x28] sm:$0xff] %vm226, %v195
    %233 = vst.msk [vmem:[#allocation5 + $0x30] sm:$0xff] %vm226, %v198
    %234 = vst.msk [vmem:[#allocation5 + $0x38] sm:$0xff] %vm226, %v201
    %235 = vst.msk [vmem:[#allocation5 + $0x40] sm:$0xff] %vm226, %v204
    %236 = vst.msk [vmem:[#allocation5 + $0x48] sm:$0xff] %vm226, %v207
    %237 = vst.msk [vmem:[#allocation5 + $0x50] sm:$0xff] %vm226, %v210
    %238 = vst.msk [vmem:[#allocation5 + $0x58] sm:$0xff] %vm226, %v213
    %239 = vst.msk [vmem:[#allocation5 + $0x60] sm:$0xff] %vm226, %v216
    %240 = vst.msk [vmem:[#allocation5 + $0x68] sm:$0xff] %vm226, %v219
    %241 = vst.msk [vmem:[#allocation5 + $0x70] sm:$0xff] %vm226, %v222
    %242 = vst.msk [vmem:[#allocation5 + $0x78] sm:$0xff] %vm226, %v225
    %243 = vst.msk [vmem:[#allocation3] sm:$0xff] %vm226, -1e+30
    %244 = vst.msk [vmem:[#allocation3 + $0x8] sm:$0xff] %vm226, -1e+30
    %245 = vst.msk [vmem:[#allocation3 + $0x10] sm:$0xff] %vm226, -1e+30
    %246 = vst.msk [vmem:[#allocation3 + $0x18] sm:$0xff] %vm226, -1e+30
    %247 = vst.msk [vmem:[#allocation3 + $0x20] sm:$0xff] %vm226, -1e+30
    %248 = vst.msk [vmem:[#allocation3 + $0x28] sm:$0xff] %vm226, -1e+30
    %249 = vst.msk [vmem:[#allocation3 + $0x30] sm:$0xff] %vm226, -1e+30
    %250 = vst.msk [vmem:[#allocation3 + $0x38] sm:$0xff] %vm226, -1e+30
    %251 = vst.msk [vmem:[#allocation3 + $0x40] sm:$0xff] %vm226, -1e+30
    %252 = vst.msk [vmem:[#allocation3 + $0x48] sm:$0xff] %vm226, -1e+30
    %253 = vst.msk [vmem:[#allocation3 + $0x50] sm:$0xff] %vm226, -1e+30
    %254 = vst.msk [vmem:[#allocation3 + $0x58] sm:$0xff] %vm226, -1e+30
    %255 = vst.msk [vmem:[#allocation3 + $0x60] sm:$0xff] %vm226, -1e+30
    %256 = vst.msk [vmem:[#allocation3 + $0x68] sm:$0xff] %vm226, -1e+30
    %257 = vst.msk [vmem:[#allocation3 + $0x70] sm:$0xff] %vm226, -1e+30
    %258 = vst.msk [vmem:[#allocation3 + $0x78] sm:$0xff] %vm226, -1e+30
    %259 = vst.msk [vmem:[#allocation4] sm:$0xff] %vm226, 0.0
    %260 = vst.msk [vmem:[#allocation4 + $0x8] sm:$0xff] %vm226, 0.0
    %261 = vst.msk [vmem:[#allocation4 + $0x10] sm:$0xff] %vm226, 0.0
    %262 = vst.msk [vmem:[#allocation4 + $0x18] sm:$0xff] %vm226, 0.0
    %263 = vst.msk [vmem:[#allocation4 + $0x20] sm:$0xff] %vm226, 0.0
    %264 = vst.msk [vmem:[#allocation4 + $0x28] sm:$0xff] %vm226, 0.0
    %265 = vst.msk [vmem:[#allocation4 + $0x30] sm:$0xff] %vm226, 0.0
    %266 = vst.msk [vmem:[#allocation4 + $0x38] sm:$0xff] %vm226, 0.0
    %267 = vst.msk [vmem:[#allocation4 + $0x40] sm:$0xff] %vm226, 0.0
    %268 = vst.msk [vmem:[#allocation4 + $0x48] sm:$0xff] %vm226, 0.0
    %269 = vst.msk [vmem:[#allocation4 + $0x50] sm:$0xff] %vm226, 0.0
    %270 = vst.msk [vmem:[#allocation4 + $0x58] sm:$0xff] %vm226, 0.0
    %271 = vst.msk [vmem:[#allocation4 + $0x60] sm:$0xff] %vm226, 0.0
    %272 = vst.msk [vmem:[#allocation4 + $0x68] sm:$0xff] %vm226, 0.0
    %273 = vst.msk [vmem:[#allocation4 + $0x70] sm:$0xff] %vm226, 0.0
    %274 = vst.msk [vmem:[#allocation4 + $0x78] sm:$0xff] %vm226, 0.0
  $region13: #{contrastive_loss.1} parent=0 // pred_fallthru
    _
  %v275 = vld [vmem:[#allocation2] sm:$0xf]
  %v276 = vld [vmem:[#allocation2 + $0x4] sm:$0xf]
  %v277 = vld [vmem:[#allocation2 + $0x8] sm:$0xf]
  %v278 = vld [vmem:[#allocation2 + $0xc] sm:$0xf]
  %v279 = vld [vmem:[#allocation2 + $0x10] sm:$0xf]
  %v280 = vld [vmem:[#allocation2 + $0x14] sm:$0xf]
  %v281 = vld [vmem:[#allocation2 + $0x18] sm:$0xf]
  %v282 = vld [vmem:[#allocation2 + $0x1c] sm:$0xf]
  %v283 = vld [vmem:[#allocation2 + $0x20] sm:$0xf]
  %v284 = vld [vmem:[#allocation2 + $0x24] sm:$0xf]
  %v285 = vld [vmem:[#allocation2 + $0x28] sm:$0xf]
  %v286 = vld [vmem:[#allocation2 + $0x2c] sm:$0xf]
  %v287 = vld [vmem:[#allocation2 + $0x30] sm:$0xf]
  %v288 = vld [vmem:[#allocation2 + $0x34] sm:$0xf]
  %v289 = vld [vmem:[#allocation2 + $0x38] sm:$0xf]
  %v290 = vld [vmem:[#allocation2 + $0x3c] sm:$0xf]
  %v291 = vld [vmem:[%s1] sm:$0xf]
  %v292 = vld [vmem:[%s1 + $0x4] sm:$0xf]
  %v293 = vld [vmem:[%s1 + $0x8] sm:$0xf]
  %v294 = vld [vmem:[%s1 + $0xc] sm:$0xf]
  %v295 = vld [vmem:[%s1 + $0x10] sm:$0xf]
  %v296 = vld [vmem:[%s1 + $0x14] sm:$0xf]
  %v297 = vld [vmem:[%s1 + $0x18] sm:$0xf]
  %v298 = vld [vmem:[%s1 + $0x1c] sm:$0xf]
  %v299 = vld [vmem:[%s1 + $0x20] sm:$0xf]
  %v300 = vld [vmem:[%s1 + $0x24] sm:$0xf]
  %v301 = vld [vmem:[%s1 + $0x28] sm:$0xf]
  %v302 = vld [vmem:[%s1 + $0x2c] sm:$0xf]
  %v303 = vld [vmem:[%s1 + $0x30] sm:$0xf]
  %v304 = vld [vmem:[%s1 + $0x34] sm:$0xf]
  %v305 = vld [vmem:[%s1 + $0x38] sm:$0xf]
  %v306 = vld [vmem:[%s1 + $0x3c] sm:$0xf]
  %v323 = vunpack.c.l.b16 %v275
  %v324 = vunpack.c.l.b16 %v276
  %v325 = vunpack.c.l.b16 %v277
  %v326 = vunpack.c.l.b16 %v278
  %v327 = vunpack.c.l.b16 %v279
  %v328 = vunpack.c.l.b16 %v280
  %v329 = vunpack.c.l.b16 %v281
  %v330 = vunpack.c.l.b16 %v282
  %v331 = vunpack.c.l.b16 %v283
  %v332 = vunpack.c.l.b16 %v284
  %v333 = vunpack.c.l.b16 %v285
  %v334 = vunpack.c.l.b16 %v286
  %v335 = vunpack.c.l.b16 %v287
  %v336 = vunpack.c.l.b16 %v288
  %v337 = vunpack.c.l.b16 %v289
  %v338 = vunpack.c.l.b16 %v290
  %v339 = vpack.c.b16 %v324, %v323
  %v340 = vpack.c.b16 %v326, %v325
  %v341 = vpack.c.b16 %v328, %v327
  %v342 = vpack.c.b16 %v330, %v329
  %v343 = vpack.c.b16 %v332, %v331
  %v344 = vpack.c.b16 %v334, %v333
  %v345 = vpack.c.b16 %v336, %v335
  %v346 = vpack.c.b16 %v338, %v337
  %v363 = vunpack.c.l.b16 %v291
  %v364 = vunpack.c.l.b16 %v292
  %v365 = vunpack.c.l.b16 %v293
  %v366 = vunpack.c.l.b16 %v294
  %v367 = vunpack.c.l.b16 %v295
  %v368 = vunpack.c.l.b16 %v296
  %v369 = vunpack.c.l.b16 %v297
  %v370 = vunpack.c.l.b16 %v298
  %v371 = vunpack.c.l.b16 %v299
  %v372 = vunpack.c.l.b16 %v300
  %v373 = vunpack.c.l.b16 %v301
  %v374 = vunpack.c.l.b16 %v302
  %v375 = vunpack.c.l.b16 %v303
  %v376 = vunpack.c.l.b16 %v304
  %v377 = vunpack.c.l.b16 %v305
  %v378 = vunpack.c.l.b16 %v306
  %v379 = vpack.c.b16 %v364, %v363
  %v380 = vpack.c.b16 %v366, %v365
  %v381 = vpack.c.b16 %v368, %v367
  %v382 = vpack.c.b16 %v370, %v369
  %v383 = vpack.c.b16 %v372, %v371
  %v384 = vpack.c.b16 %v374, %v373
  %v385 = vpack.c.b16 %v376, %v375
  %v386 = vpack.c.b16 %v378, %v377
  %vm387 = vcmask 261120
  %v389 = vsel %vm387, %v339, 0
  %v392 = vsel %vm387, %v340, 0
  %v395 = vsel %vm387, %v341, 0
  %v398 = vsel %vm387, %v342, 0
  %v401 = vsel %vm387, %v343, 0
  %v404 = vsel %vm387, %v344, 0
  %v407 = vsel %vm387, %v345, 0
  %v410 = vsel %vm387, %v346, 0
  %v413 = vsel %vm387, %v379, 0
  %v416 = vsel %vm387, %v380, 0
  %v419 = vsel %vm387, %v381, 0
  %v422 = vsel %vm387, %v382, 0
  %v425 = vsel %vm387, %v383, 0
  %v428 = vsel %vm387, %v384, 0
  %v431 = vsel %vm387, %v385, 0
  %v434 = vsel %vm387, %v386, 0
  %436 = vmatprep.subr.bf16.mxu0 0
  %437 = vmatpush1.bf16.xpose.msra.mxu0 %v434
  %438 = vmatprep.subr.bf16.mxu0 0
  %439 = vmatpush1.bf16.xpose.msra.mxu0 %v431
  %440 = vmatprep.subr.bf16.mxu0 0
  %441 = vmatpush1.bf16.xpose.msra.mxu0 %v428
  %442 = vmatprep.subr.bf16.mxu0 0
  %443 = vmatpush1.bf16.xpose.msra.mxu0 %v425
  %444 = vmatprep.subr.bf16.mxu0 0
  %445 = vmatpush1.bf16.xpose.msra.mxu0 %v422
  %446 = vmatprep.subr.bf16.mxu0 0
  %447 = vmatpush1.bf16.xpose.msra.mxu0 %v419
  %448 = vmatprep.subr.bf16.mxu0 0
  %449 = vmatpush1.bf16.xpose.msra.mxu0 %v416
  %450 = vmatprep.subr.bf16.mxu0 0
  %451 = vmatpush1.bf16.xpose.msra.mxu0 %v413
  %452 = vmatprep.subr.bf16.mxu0 0
  %453 = vmatpush2.bf16.xpose.msra.mxu0 0
  %454 = vmatprep.subr.bf16.mxu0 0
  %455 = vmatpush2.bf16.xpose.msra.mxu0 0
  %456 = vmatprep.subr.bf16.mxu0 0
  %457 = vmatpush2.bf16.xpose.msra.mxu0 0
  %458 = vmatprep.subr.bf16.mxu0 0
  %459 = vmatpush2.bf16.xpose.msra.mxu0 0
  %460 = vmatprep.subr.bf16.mxu0 0
  %461 = vmatpush2.bf16.xpose.msra.mxu0 0
  %462 = vmatprep.subr.bf16.mxu0 0
  %463 = vmatpush2.bf16.xpose.msra.mxu0 0
  %464 = vmatprep.subr.bf16.mxu0 0
  %465 = vmatpush2.bf16.xpose.msra.mxu0 0
  %466 = vmatprep.subr.bf16.mxu0 0
  %467 = vmatpush2.bf16.xpose.msra.mxu0 0
  %468 = vmatprep.mubr.bf16.mxu0 0
  %469 = vmatmul.mubr.bf16.gmra.mxu0 %v389
  %v470 = vpop.f32.mrf.mxu0
  %v471 = vadd.f32 0.0, %v470
  %v472 = vpop.f32.mrf.mxu0
  %v473 = vpop.f32.mrf.mxu0
  %v474 = vadd.f32 0.0, %v473
  %v475 = vpop.f32.mrf.mxu0
  %476 = vmatprep.mubr.bf16.mxu0 0
  %477 = vmatmul.mubr.bf16.gmra.mxu0 %v392
  %v478 = vpop.f32.mrf.mxu0
  %v479 = vadd.f32 0.0, %v478
  %v480 = vpop.f32.mrf.mxu0
  %v481 = vpop.f32.mrf.mxu0
  %v482 = vadd.f32 0.0, %v481
  %v483 = vpop.f32.mrf.mxu0
  %484 = vmatprep.mubr.bf16.mxu0 0
  %485 = vmatmul.mubr.bf16.gmra.mxu0 %v395
  %v486 = vpop.f32.mrf.mxu0
  %v487 = vadd.f32 0.0, %v486
  %v488 = vpop.f32.mrf.mxu0
  %v489 = vpop.f32.mrf.mxu0
  %v490 = vadd.f32 0.0, %v489
  %v491 = vpop.f32.mrf.mxu0
  %492 = vmatprep.mubr.bf16.mxu0 0
  %493 = vmatmul.mubr.bf16.gmra.mxu0 %v398
  %v494 = vpop.f32.mrf.mxu0
  %v495 = vadd.f32 0.0, %v494
  %v496 = vpop.f32.mrf.mxu0
  %v497 = vpop.f32.mrf.mxu0
  %v498 = vadd.f32 0.0, %v497
  %v499 = vpop.f32.mrf.mxu0
  %500 = vmatprep.mubr.bf16.mxu0 0
  %501 = vmatmul.mubr.bf16.gmra.mxu0 %v401
  %v502 = vpop.f32.mrf.mxu0
  %v503 = vadd.f32 0.0, %v502
  %v504 = vpop.f32.mrf.mxu0
  %v505 = vpop.f32.mrf.mxu0
  %v506 = vadd.f32 0.0, %v505
  %v507 = vpop.f32.mrf.mxu0
  %508 = vmatprep.mubr.bf16.mxu0 0
  %509 = vmatmul.mubr.bf16.gmra.mxu0 %v404
  %v510 = vpop.f32.mrf.mxu0
  %v511 = vadd.f32 0.0, %v510
  %v512 = vpop.f32.mrf.mxu0
  %v513 = vpop.f32.mrf.mxu0
  %v514 = vadd.f32 0.0, %v513
  %v515 = vpop.f32.mrf.mxu0
  %516 = vmatprep.mubr.bf16.mxu0 0
  %517 = vmatmul.mubr.bf16.gmra.mxu0 %v407
  %v518 = vpop.f32.mrf.mxu0
  %v519 = vadd.f32 0.0, %v518
  %v520 = vpop.f32.mrf.mxu0
  %v521 = vpop.f32.mrf.mxu0
  %v522 = vadd.f32 0.0, %v521
  %v523 = vpop.f32.mrf.mxu0
  %524 = vmatprep.mubr.bf16.mxu0 0
  %525 = vmatmul.mubr.bf16.gmra.mxu0 %v410
  %v526 = vpop.f32.mrf.mxu0
  %v527 = vadd.f32 0.0, %v526
  %v528 = vpop.f32.mrf.mxu0
  %v529 = vpop.f32.mrf.mxu0
  %v530 = vadd.f32 0.0, %v529
  %v531 = vpop.f32.mrf.mxu0
  %532 = vdwg.mxu0
  %s533 = smul.u32 0, 128
  %v534 = vlaneseq
  %v535 = vand.u32 %v534, 127
  %v536 = vstv %s533
  %v537 = vadd.s32 %v536, %v535
  %vm538 = vcmp.lt.s32.totalorder %v537, 8
  %v539 = vsel %vm538, %v471, -1e+30
  %v540 = vsel %vm538, %v474, -1e+30
  %v541 = vsel %vm538, %v479, -1e+30
  %v542 = vsel %vm538, %v482, -1e+30
  %v543 = vsel %vm538, %v487, -1e+30
  %v544 = vsel %vm538, %v490, -1e+30
  %v545 = vsel %vm538, %v495, -1e+30
  %v546 = vsel %vm538, %v498, -1e+30
  %v547 = vsel %vm538, %v503, -1e+30
  %v548 = vsel %vm538, %v506, -1e+30
  %v549 = vsel %vm538, %v511, -1e+30
  %v550 = vsel %vm538, %v514, -1e+30
  %v551 = vsel %vm538, %v519, -1e+30
  %v552 = vsel %vm538, %v522, -1e+30
  %v553 = vsel %vm538, %v527, -1e+30
  %v554 = vsel %vm538, %v530, -1e+30
  %v555 = vld [vmem:[#allocation3] sm:$0xff]
  %v556 = vld [vmem:[#allocation3 + $0x8] sm:$0xff]
  %v557 = vld [vmem:[#allocation3 + $0x10] sm:$0xff]
  %v558 = vld [vmem:[#allocation3 + $0x18] sm:$0xff]
  %v559 = vld [vmem:[#allocation3 + $0x20] sm:$0xff]
  %v560 = vld [vmem:[#allocation3 + $0x28] sm:$0xff]
  %v561 = vld [vmem:[#allocation3 + $0x30] sm:$0xff]
  %v562 = vld [vmem:[#allocation3 + $0x38] sm:$0xff]
  %v563 = vld [vmem:[#allocation3 + $0x40] sm:$0xff]
  %v564 = vld [vmem:[#allocation3 + $0x48] sm:$0xff]
  %v565 = vld [vmem:[#allocation3 + $0x50] sm:$0xff]
  %v566 = vld [vmem:[#allocation3 + $0x58] sm:$0xff]
  %v567 = vld [vmem:[#allocation3 + $0x60] sm:$0xff]
  %v568 = vld [vmem:[#allocation3 + $0x68] sm:$0xff]
  %v569 = vld [vmem:[#allocation3 + $0x70] sm:$0xff]
  %v570 = vld [vmem:[#allocation3 + $0x78] sm:$0xff]
  %571 = vmax.xlane.f32.xlu0 %v539
  %v572 = vpop.xlane.xlu0 %571
  %573 = vmax.xlane.f32.xlu0 %v540
  %v574 = vpop.xlane.xlu0 %573
  %575 = vmax.xlane.f32.xlu0 %v541
  %v576 = vpop.xlane.xlu0 %575
  %577 = vmax.xlane.f32.xlu0 %v542
  %v578 = vpop.xlane.xlu0 %577
  %579 = vmax.xlane.f32.xlu0 %v543
  %v580 = vpop.xlane.xlu0 %579
  %581 = vmax.xlane.f32.xlu0 %v544
  %v582 = vpop.xlane.xlu0 %581
  %583 = vmax.xlane.f32.xlu0 %v545
  %v584 = vpop.xlane.xlu0 %583
  %585 = vmax.xlane.f32.xlu0 %v546
  %v586 = vpop.xlane.xlu0 %585
  %587 = vmax.xlane.f32.xlu0 %v547
  %v588 = vpop.xlane.xlu0 %587
  %589 = vmax.xlane.f32.xlu0 %v548
  %v590 = vpop.xlane.xlu0 %589
  %591 = vmax.xlane.f32.xlu0 %v549
  %v592 = vpop.xlane.xlu0 %591
  %593 = vmax.xlane.f32.xlu0 %v550
  %v594 = vpop.xlane.xlu0 %593
  %595 = vmax.xlane.f32.xlu0 %v551
  %v596 = vpop.xlane.xlu0 %595
  %597 = vmax.xlane.f32.xlu0 %v552
  %v598 = vpop.xlane.xlu0 %597
  %599 = vmax.xlane.f32.xlu0 %v553
  %v600 = vpop.xlane.xlu0 %599
  %601 = vmax.xlane.f32.xlu0 %v554
  %v602 = vpop.xlane.xlu0 %601
  %v603 = vmax.f32 %v555, %v572
  %v604 = vmax.f32 %v556, %v574
  %v605 = vmax.f32 %v557, %v576
  %v606 = vmax.f32 %v558, %v578
  %v607 = vmax.f32 %v559, %v580
  %v608 = vmax.f32 %v560, %v582
  %v609 = vmax.f32 %v561, %v584
  %v610 = vmax.f32 %v562, %v586
  %v611 = vmax.f32 %v563, %v588
  %v612 = vmax.f32 %v564, %v590
  %v613 = vmax.f32 %v565, %v592
  %v614 = vmax.f32 %v566, %v594
  %v615 = vmax.f32 %v567, %v596
  %v616 = vmax.f32 %v568, %v598
  %v617 = vmax.f32 %v569, %v600
  %v618 = vmax.f32 %v570, %v602
  %v619 = vsub.f32 %v555, %v603
  %v620 = vsub.f32 %v556, %v604
  %v621 = vsub.f32 %v557, %v605
  %v622 = vsub.f32 %v558, %v606
  %v623 = vsub.f32 %v559, %v607
  %v624 = vsub.f32 %v560, %v608
  %v625 = vsub.f32 %v561, %v609
  %v626 = vsub.f32 %v562, %v610
  %v627 = vsub.f32 %v563, %v611
  %v628 = vsub.f32 %v564, %v612
  %v629 = vsub.f32 %v565, %v613
  %v630 = vsub.f32 %v566, %v614
  %v631 = vsub.f32 %v567, %v615
  %v632 = vsub.f32 %v568, %v616
  %v633 = vsub.f32 %v569, %v617
  %v634 = vsub.f32 %v570, %v618
  %v635 = vmul.f32 %v619, 1.442695
  %v636 = vpow.pop %v635
  %v637 = vmul.f32 %v620, 1.442695
  %v638 = vpow.pop %v637
  %v639 = vmul.f32 %v621, 1.442695
  %v640 = vpow.pop %v639
  %v641 = vmul.f32 %v622, 1.442695
  %v642 = vpow.pop %v641
  %v643 = vmul.f32 %v623, 1.442695
  %v644 = vpow.pop %v643
  %v645 = vmul.f32 %v624, 1.442695
  %v646 = vpow.pop %v645
  %v647 = vmul.f32 %v625, 1.442695
  %v648 = vpow.pop %v647
  %v649 = vmul.f32 %v626, 1.442695
  %v650 = vpow.pop %v649
  %v651 = vmul.f32 %v627, 1.442695
  %v652 = vpow.pop %v651
  %v653 = vmul.f32 %v628, 1.442695
  %v654 = vpow.pop %v653
  %v655 = vmul.f32 %v629, 1.442695
  %v656 = vpow.pop %v655
  %v657 = vmul.f32 %v630, 1.442695
  %v658 = vpow.pop %v657
  %v659 = vmul.f32 %v631, 1.442695
  %v660 = vpow.pop %v659
  %v661 = vmul.f32 %v632, 1.442695
  %v662 = vpow.pop %v661
  %v663 = vmul.f32 %v633, 1.442695
  %v664 = vpow.pop %v663
  %v665 = vmul.f32 %v634, 1.442695
  %v666 = vpow.pop %v665
  %v667 = vld [vmem:[#allocation4] sm:$0xff]
  %v668 = vld [vmem:[#allocation4 + $0x8] sm:$0xff]
  %v669 = vld [vmem:[#allocation4 + $0x10] sm:$0xff]
  %v670 = vld [vmem:[#allocation4 + $0x18] sm:$0xff]
  %v671 = vld [vmem:[#allocation4 + $0x20] sm:$0xff]
  %v672 = vld [vmem:[#allocation4 + $0x28] sm:$0xff]
  %v673 = vld [vmem:[#allocation4 + $0x30] sm:$0xff]
  %v674 = vld [vmem:[#allocation4 + $0x38] sm:$0xff]
  %v675 = vld [vmem:[#allocation4 + $0x40] sm:$0xff]
  %v676 = vld [vmem:[#allocation4 + $0x48] sm:$0xff]
  %v677 = vld [vmem:[#allocation4 + $0x50] sm:$0xff]
  %v678 = vld [vmem:[#allocation4 + $0x58] sm:$0xff]
  %v679 = vld [vmem:[#allocation4 + $0x60] sm:$0xff]
  %v680 = vld [vmem:[#allocation4 + $0x68] sm:$0xff]
  %v681 = vld [vmem:[#allocation4 + $0x70] sm:$0xff]
  %v682 = vld [vmem:[#allocation4 + $0x78] sm:$0xff]
  %v683 = vmul.f32 %v636, %v667
  %v684 = vmul.f32 %v638, %v668
  %v685 = vmul.f32 %v640, %v669
  %v686 = vmul.f32 %v642, %v670
  %v687 = vmul.f32 %v644, %v671
  %v688 = vmul.f32 %v646, %v672
  %v689 = vmul.f32 %v648, %v673
  %v690 = vmul.f32 %v650, %v674
  %v691 = vmul.f32 %v652, %v675
  %v692 = vmul.f32 %v654, %v676
  %v693 = vmul.f32 %v656, %v677
  %v694 = vmul.f32 %v658, %v678
  %v695 = vmul.f32 %v660, %v679
  %v696 = vmul.f32 %v662, %v680
  %v697 = vmul.f32 %v664, %v681
  %v698 = vmul.f32 %v666, %v682
  %700 = vset.pattern.permute.xlu0 0
  %701 = vperm.xlu0 %700, %v603
  %v702 = vpop.permute.xlu0 %701
  %705 = vset.pattern.permute.xlu0 0
  %706 = vperm.xlu0 %705, %v604
  %v707 = vpop.permute.xlu0 %706
  %710 = vset.pattern.permute.xlu0 0
  %711 = vperm.xlu0 %710, %v605
  %v712 = vpop.permute.xlu0 %711
  %715 = vset.pattern.permute.xlu0 0
  %716 = vperm.xlu0 %715, %v606
  %v717 = vpop.permute.xlu0 %716
  %720 = vset.pattern.permute.xlu0 0
  %721 = vperm.xlu0 %720, %v607
  %v722 = vpop.permute.xlu0 %721
  %725 = vset.pattern.permute.xlu0 0
  %726 = vperm.xlu0 %725, %v608
  %v727 = vpop.permute.xlu0 %726
  %730 = vset.pattern.permute.xlu0 0
  %731 = vperm.xlu0 %730, %v609
  %v732 = vpop.permute.xlu0 %731
  %735 = vset.pattern.permute.xlu0 0
  %736 = vperm.xlu0 %735, %v610
  %v737 = vpop.permute.xlu0 %736
  %740 = vset.pattern.permute.xlu0 0
  %741 = vperm.xlu0 %740, %v611
  %v742 = vpop.permute.xlu0 %741
  %745 = vset.pattern.permute.xlu0 0
  %746 = vperm.xlu0 %745, %v612
  %v747 = vpop.permute.xlu0 %746
  %750 = vset.pattern.permute.xlu0 0
  %751 = vperm.xlu0 %750, %v613
  %v752 = vpop.permute.xlu0 %751
  %755 = vset.pattern.permute.xlu0 0
  %756 = vperm.xlu0 %755, %v614
  %v757 = vpop.permute.xlu0 %756
  %760 = vset.pattern.permute.xlu0 0
  %761 = vperm.xlu0 %760, %v615
  %v762 = vpop.permute.xlu0 %761
  %765 = vset.pattern.permute.xlu0 0
  %766 = vperm.xlu0 %765, %v616
  %v767 = vpop.permute.xlu0 %766
  %770 = vset.pattern.permute.xlu0 0
  %771 = vperm.xlu0 %770, %v617
  %v772 = vpop.permute.xlu0 %771
  %775 = vset.pattern.permute.xlu0 0
  %776 = vperm.xlu0 %775, %v618
  %v777 = vpop.permute.xlu0 %776
  %v779 = vsub.f32 %v539, %v702
  %v780 = vsub.f32 %v540, %v707
  %v781 = vsub.f32 %v541, %v712
  %v782 = vsub.f32 %v542, %v717
  %v783 = vsub.f32 %v543, %v722
  %v784 = vsub.f32 %v544, %v727
  %v785 = vsub.f32 %v545, %v732
  %v786 = vsub.f32 %v546, %v737
  %v787 = vsub.f32 %v547, %v742
  %v788 = vsub.f32 %v548, %v747
  %v789 = vsub.f32 %v549, %v752
  %v790 = vsub.f32 %v550, %v757
  %v791 = vsub.f32 %v551, %v762
  %v792 = vsub.f32 %v552, %v767
  %v793 = vsub.f32 %v553, %v772
  %v794 = vsub.f32 %v554, %v777
  %v795 = vmul.f32 %v779, 1.442695
  %v796 = vpow.pop %v795
  %v797 = vmul.f32 %v780, 1.442695
  %v798 = vpow.pop %v797
  %v799 = vmul.f32 %v781, 1.442695
  %v800 = vpow.pop %v799
  %v801 = vmul.f32 %v782, 1.442695
  %v802 = vpow.pop %v801
  %v803 = vmul.f32 %v783, 1.442695
  %v804 = vpow.pop %v803
  %v805 = vmul.f32 %v784, 1.442695
  %v806 = vpow.pop %v805
  %v807 = vmul.f32 %v785, 1.442695
  %v808 = vpow.pop %v807
  %v809 = vmul.f32 %v786, 1.442695
  %v810 = vpow.pop %v809
  %v811 = vmul.f32 %v787, 1.442695
  %v812 = vpow.pop %v811
  %v813 = vmul.f32 %v788, 1.442695
  %v814 = vpow.pop %v813
  %v815 = vmul.f32 %v789, 1.442695
  %v816 = vpow.pop %v815
  %v817 = vmul.f32 %v790, 1.442695
  %v818 = vpow.pop %v817
  %v819 = vmul.f32 %v791, 1.442695
  %v820 = vpow.pop %v819
  %v821 = vmul.f32 %v792, 1.442695
  %v822 = vpow.pop %v821
  %v823 = vmul.f32 %v793, 1.442695
  %v824 = vpow.pop %v823
  %v825 = vmul.f32 %v794, 1.442695
  %v826 = vpow.pop %v825
  %827 = vadd.xlane.f32.xlu0 %v796
  %v828 = vpop.xlane.xlu0 %827
  %829 = vadd.xlane.f32.xlu0 %v798
  %v830 = vpop.xlane.xlu0 %829
  %831 = vadd.xlane.f32.xlu0 %v800
  %v832 = vpop.xlane.xlu0 %831
  %833 = vadd.xlane.f32.xlu0 %v802
  %v834 = vpop.xlane.xlu0 %833
  %835 = vadd.xlane.f32.xlu0 %v804
  %v836 = vpop.xlane.xlu0 %835
  %837 = vadd.xlane.f32.xlu0 %v806
  %v838 = vpop.xlane.xlu0 %837
  %839 = vadd.xlane.f32.xlu0 %v808
  %v840 = vpop.xlane.xlu0 %839
  %841 = vadd.xlane.f32.xlu0 %v810
  %v842 = vpop.xlane.xlu0 %841
  %843 = vadd.xlane.f32.xlu0 %v812
  %v844 = vpop.xlane.xlu0 %843
  %845 = vadd.xlane.f32.xlu0 %v814
  %v846 = vpop.xlane.xlu0 %845
  %847 = vadd.xlane.f32.xlu0 %v816
  %v848 = vpop.xlane.xlu0 %847
  %849 = vadd.xlane.f32.xlu0 %v818
  %v850 = vpop.xlane.xlu0 %849
  %851 = vadd.xlane.f32.xlu0 %v820
  %v852 = vpop.xlane.xlu0 %851
  %853 = vadd.xlane.f32.xlu0 %v822
  %v854 = vpop.xlane.xlu0 %853
  %855 = vadd.xlane.f32.xlu0 %v824
  %v856 = vpop.xlane.xlu0 %855
  %857 = vadd.xlane.f32.xlu0 %v826
  %v858 = vpop.xlane.xlu0 %857
  %v859 = vadd.f32 %v683, %v828
  %v860 = vadd.f32 %v684, %v830
  %v861 = vadd.f32 %v685, %v832
  %v862 = vadd.f32 %v686, %v834
  %v863 = vadd.f32 %v687, %v836
  %v864 = vadd.f32 %v688, %v838
  %v865 = vadd.f32 %v689, %v840
  %v866 = vadd.f32 %v690, %v842
  %v867 = vadd.f32 %v691, %v844
  %v868 = vadd.f32 %v692, %v846
  %v869 = vadd.f32 %v693, %v848
  %v870 = vadd.f32 %v694, %v850
  %v871 = vadd.f32 %v695, %v852
  %v872 = vadd.f32 %v696, %v854
  %v873 = vadd.f32 %v697, %v856
  %v874 = vadd.f32 %v698, %v858
  %vm875 = vcmask 7168
  %876 = vst.msk [vmem:[#allocation4] sm:$0xff] %vm875, %v859
  %877 = vst.msk [vmem:[#allocation4 + $0x8] sm:$0xff] %vm875, %v860
  %878 = vst.msk [vmem:[#allocation4 + $0x10] sm:$0xff] %vm875, %v861
  %879 = vst.msk [vmem:[#allocation4 + $0x18] sm:$0xff] %vm875, %v862
  %880 = vst.msk [vmem:[#allocation4 + $0x20] sm:$0xff] %vm875, %v863
  %881 = vst.msk [vmem:[#allocation4 + $0x28] sm:$0xff] %vm875, %v864
  %882 = vst.msk [vmem:[#allocation4 + $0x30] sm:$0xff] %vm875, %v865
  %883 = vst.msk [vmem:[#allocation4 + $0x38] sm:$0xff] %vm875, %v866
  %884 = vst.msk [vmem:[#allocation4 + $0x40] sm:$0xff] %vm875, %v867
  %885 = vst.msk [vmem:[#allocation4 + $0x48] sm:$0xff] %vm875, %v868
  %886 = vst.msk [vmem:[#allocation4 + $0x50] sm:$0xff] %vm875, %v869
  %887 = vst.msk [vmem:[#allocation4 + $0x58] sm:$0xff] %vm875, %v870
  %888 = vst.msk [vmem:[#allocation4 + $0x60] sm:$0xff] %vm875, %v871
  %889 = vst.msk [vmem:[#allocation4 + $0x68] sm:$0xff] %vm875, %v872
  %890 = vst.msk [vmem:[#allocation4 + $0x70] sm:$0xff] %vm875, %v873
  %891 = vst.msk [vmem:[#allocation4 + $0x78] sm:$0xff] %vm875, %v874
  %892 = vst.msk [vmem:[#allocation3] sm:$0xff] %vm875, %v603
  %893 = vst.msk [vmem:[#allocation3 + $0x8] sm:$0xff] %vm875, %v604
  %894 = vst.msk [vmem:[#allocation3 + $0x10] sm:$0xff] %vm875, %v605
  %895 = vst.msk [vmem:[#allocation3 + $0x18] sm:$0xff] %vm875, %v606
  %896 = vst.msk [vmem:[#allocation3 + $0x20] sm:$0xff] %vm875, %v607
  %897 = vst.msk [vmem:[#allocation3 + $0x28] sm:$0xff] %vm875, %v608
  %898 = vst.msk [vmem:[#allocation3 + $0x30] sm:$0xff] %vm875, %v609
  %899 = vst.msk [vmem:[#allocation3 + $0x38] sm:$0xff] %vm875, %v610
  %900 = vst.msk [vmem:[#allocation3 + $0x40] sm:$0xff] %vm875, %v611
  %901 = vst.msk [vmem:[#allocation3 + $0x48] sm:$0xff] %vm875, %v612
  %902 = vst.msk [vmem:[#allocation3 + $0x50] sm:$0xff] %vm875, %v613
  %903 = vst.msk [vmem:[#allocation3 + $0x58] sm:$0xff] %vm875, %v614
  %904 = vst.msk [vmem:[#allocation3 + $0x60] sm:$0xff] %vm875, %v615
  %905 = vst.msk [vmem:[#allocation3 + $0x68] sm:$0xff] %vm875, %v616
  %906 = vst.msk [vmem:[#allocation3 + $0x70] sm:$0xff] %vm875, %v617
  %907 = vst.msk [vmem:[#allocation3 + $0x78] sm:$0xff] %vm875, %v618
  // Predicated region
  $region14: #{contrastive_loss.1} parent=0 // pred_check
    %p908 = pneg %p12
  $region15: #{contrastive_loss.1} parent=0 // pred_check_branch
    %910 = sbr.rel (%p908) target = $region17
  $region16: #{contrastive_loss.1} parent=0 // pred_region
    %v911 = vld [vmem:[#allocation3] sm:$0xff]
    %v912 = vld [vmem:[#allocation3 + $0x8] sm:$0xff]
    %v913 = vld [vmem:[#allocation3 + $0x10] sm:$0xff]
    %v914 = vld [vmem:[#allocation3 + $0x18] sm:$0xff]
    %v915 = vld [vmem:[#allocation3 + $0x20] sm:$0xff]
    %v916 = vld [vmem:[#allocation3 + $0x28] sm:$0xff]
    %v917 = vld [vmem:[#allocation3 + $0x30] sm:$0xff]
    %v918 = vld [vmem:[#allocation3 + $0x38] sm:$0xff]
    %v919 = vld [vmem:[#allocation3 + $0x40] sm:$0xff]
    %v920 = vld [vmem:[#allocation3 + $0x48] sm:$0xff]
    %v921 = vld [vmem:[#allocation3 + $0x50] sm:$0xff]
    %v922 = vld [vmem:[#allocation3 + $0x58] sm:$0xff]
    %v923 = vld [vmem:[#allocation3 + $0x60] sm:$0xff]
    %v924 = vld [vmem:[#allocation3 + $0x68] sm:$0xff]
    %v925 = vld [vmem:[#allocation3 + $0x70] sm:$0xff]
    %v926 = vld [vmem:[#allocation3 + $0x78] sm:$0xff]
    %v927 = vld [vmem:[#allocation4] sm:$0xff]
    %v928 = vld [vmem:[#allocation4 + $0x8] sm:$0xff]
    %v929 = vld [vmem:[#allocation4 + $0x10] sm:$0xff]
    %v930 = vld [vmem:[#allocation4 + $0x18] sm:$0xff]
    %v931 = vld [vmem:[#allocation4 + $0x20] sm:$0xff]
    %v932 = vld [vmem:[#allocation4 + $0x28] sm:$0xff]
    %v933 = vld [vmem:[#allocation4 + $0x30] sm:$0xff]
    %v934 = vld [vmem:[#allocation4 + $0x38] sm:$0xff]
    %v935 = vld [vmem:[#allocation4 + $0x40] sm:$0xff]
    %v936 = vld [vmem:[#allocation4 + $0x48] sm:$0xff]
    %v937 = vld [vmem:[#allocation4 + $0x50] sm:$0xff]
    %v938 = vld [vmem:[#allocation4 + $0x58] sm:$0xff]
    %v939 = vld [vmem:[#allocation4 + $0x60] sm:$0xff]
    %v940 = vld [vmem:[#allocation4 + $0x68] sm:$0xff]
    %v941 = vld [vmem:[#allocation4 + $0x70] sm:$0xff]
    %v942 = vld [vmem:[#allocation4 + $0x78] sm:$0xff]
    %v943 = vlog2.pop %v927
    %v944 = vmul.f32 %v943, 0.6931472
    %v945 = vlog2.pop %v928
    %v946 = vmul.f32 %v945, 0.6931472
    %v947 = vlog2.pop %v929
    %v948 = vmul.f32 %v947, 0.6931472
    %v949 = vlog2.pop %v930
    %v950 = vmul.f32 %v949, 0.6931472
    %v951 = vlog2.pop %v931
    %v952 = vmul.f32 %v951, 0.6931472
    %v953 = vlog2.pop %v932
    %v954 = vmul.f32 %v953, 0.6931472
    %v955 = vlog2.pop %v933
    %v956 = vmul.f32 %v955, 0.6931472
    %v957 = vlog2.pop %v934
    %v958 = vmul.f32 %v957, 0.6931472
    %v959 = vlog2.pop %v935
    %v960 = vmul.f32 %v959, 0.6931472
    %v961 = vlog2.pop %v936
    %v962 = vmul.f32 %v961, 0.6931472
    %v963 = vlog2.pop %v937
    %v964 = vmul.f32 %v963, 0.6931472
    %v965 = vlog2.pop %v938
    %v966 = vmul.f32 %v965, 0.6931472
    %v967 = vlog2.pop %v939
    %v968 = vmul.f32 %v967, 0.6931472
    %v969 = vlog2.pop %v940
    %v970 = vmul.f32 %v969, 0.6931472
    %v971 = vlog2.pop %v941
    %v972 = vmul.f32 %v971, 0.6931472
    %v973 = vlog2.pop %v942
    %v974 = vmul.f32 %v973, 0.6931472
    %v975 = vadd.f32 %v911, %v944
    %v976 = vadd.f32 %v912, %v946
    %v977 = vadd.f32 %v913, %v948
    %v978 = vadd.f32 %v914, %v950
    %v979 = vadd.f32 %v915, %v952
    %v980 = vadd.f32 %v916, %v954
    %v981 = vadd.f32 %v917, %v956
    %v982 = vadd.f32 %v918, %v958
    %v983 = vadd.f32 %v919, %v960
    %v984 = vadd.f32 %v920, %v962
    %v985 = vadd.f32 %v921, %v964
    %v986 = vadd.f32 %v922, %v966
    %v987 = vadd.f32 %v923, %v968
    %v988 = vadd.f32 %v924, %v970
    %v989 = vadd.f32 %v925, %v972
    %v990 = vadd.f32 %v926, %v974
    %v991 = vld [vmem:[#allocation5] sm:$0xff]
    %v992 = vld [vmem:[#allocation5 + $0x8] sm:$0xff]
    %v993 = vld [vmem:[#allocation5 + $0x10] sm:$0xff]
    %v994 = vld [vmem:[#allocation5 + $0x18] sm:$0xff]
    %v995 = vld [vmem:[#allocation5 + $0x20] sm:$0xff]
    %v996 = vld [vmem:[#allocation5 + $0x28] sm:$0xff]
    %v997 = vld [vmem:[#allocation5 + $0x30] sm:$0xff]
    %v998 = vld [vmem:[#allocation5 + $0x38] sm:$0xff]
    %v999 = vld [vmem:[#allocation5 + $0x40] sm:$0xff]
    %v1000 = vld [vmem:[#allocation5 + $0x48] sm:$0xff]
    %v1001 = vld [vmem:[#allocation5 + $0x50] sm:$0xff]
    %v1002 = vld [vmem:[#allocation5 + $0x58] sm:$0xff]
    %v1003 = vld [vmem:[#allocation5 + $0x60] sm:$0xff]
    %v1004 = vld [vmem:[#allocation5 + $0x68] sm:$0xff]
    %v1005 = vld [vmem:[#allocation5 + $0x70] sm:$0xff]
    %v1006 = vld [vmem:[#allocation5 + $0x78] sm:$0xff]
    %v1007 = vsub.f32 %v975, %v991
    %v1008 = vsub.f32 %v976, %v992
    %v1009 = vsub.f32 %v977, %v993
    %v1010 = vsub.f32 %v978, %v994
    %v1011 = vsub.f32 %v979, %v995
    %v1012 = vsub.f32 %v980, %v996
    %v1013 = vsub.f32 %v981, %v997
    %v1014 = vsub.f32 %v982, %v998
    %v1015 = vsub.f32 %v983, %v999
    %v1016 = vsub.f32 %v984, %v1000
    %v1017 = vsub.f32 %v985, %v1001
    %v1018 = vsub.f32 %v986, %v1002
    %v1019 = vsub.f32 %v987, %v1003
    %v1020 = vsub.f32 %v988, %v1004
    %v1021 = vsub.f32 %v989, %v1005
    %v1022 = vsub.f32 %v990, %v1006
    %1023 = vst.msk [vmem:[%s2] sm:$0xff] %vm875, %v1007
    %1024 = vst.msk [vmem:[%s2 + $0x8] sm:$0xff] %vm875, %v1008
    %1025 = vst.msk [vmem:[%s2 + $0x10] sm:$0xff] %vm875, %v1009
    %1026 = vst.msk [vmem:[%s2 + $0x18] sm:$0xff] %vm875, %v1010
    %1027 = vst.msk [vmem:[%s2 + $0x20] sm:$0xff] %vm875, %v1011
    %1028 = vst.msk [vmem:[%s2 + $0x28] sm:$0xff] %vm875, %v1012
    %1029 = vst.msk [vmem:[%s2 + $0x30] sm:$0xff] %vm875, %v1013
    %1030 = vst.msk [vmem:[%s2 + $0x38] sm:$0xff] %vm875, %v1014
    %1031 = vst.msk [vmem:[%s2 + $0x40] sm:$0xff] %vm875, %v1015
    %1032 = vst.msk [vmem:[%s2 + $0x48] sm:$0xff] %vm875, %v1016
    %1033 = vst.msk [vmem:[%s2 + $0x50] sm:$0xff] %vm875, %v1017
    %1034 = vst.msk [vmem:[%s2 + $0x58] sm:$0xff] %vm875, %v1018
    %1035 = vst.msk [vmem:[%s2 + $0x60] sm:$0xff] %vm875, %v1019
    %1036 = vst.msk [vmem:[%s2 + $0x68] sm:$0xff] %vm875, %v1020
    %1037 = vst.msk [vmem:[%s2 + $0x70] sm:$0xff] %vm875, %v1021
    %1038 = vst.msk [vmem:[%s2 + $0x78] sm:$0xff] %vm875, %v1022
  $region17: #{contrastive_loss.1} parent=0 // pred_fallthru
    _
  // Predicated region
  $region18: #{contrastive_loss.1} parent=0 // pred_check
    _
  $region19: #{contrastive_loss.1} parent=0 // pred_check_branch
    %1040 = sbr.rel (0) target = $region21
  $region20: #{contrastive_loss.1} parent=0 // pred_region
    _
  $region21: #{contrastive_loss.1} parent=0 // pred_fallthru
    _
  // Predicated region
  $region22: #{contrastive_loss.1} parent=0 // pred_check
    _
  $region23: #{contrastive_loss.1} parent=0 // pred_check_branch
    %1042 = sbr.rel (0) target = $region25
  $region24: #{contrastive_loss.1} parent=0 // pred_region
    _
  $region25: #{contrastive_loss.1} parent=0 // pred_fallthru
    _

</llo_original>
